<compile_context>
chip_gen: v6e
topology: v6e:2x2x1
jax: 0.10.0
libtpu: 0.0.40
codegen_flags: <defaults>
</compile_context>

<pallas_src>
import functools

import jax
import jax.numpy as jnp
from jax.experimental import pallas as pl
from jax.experimental.pallas import tpu as pltpu

BN_EPS = 1e-5


def _bn_relu_masked(h, gamma, beta, mask, inv_n):
    """Training-mode BatchNorm1d over the batch (lane) axis + ReLU, fused.

    Padded lanes are excluded from the statistics via `mask`; division uses
    the true batch size (inv_n). Gamma is folded into a single rsqrt scale.
    """
    hm = h * mask
    mu = jnp.sum(hm, axis=-1, keepdims=True) * inv_n
    c = h - mu                                       # centered, reused
    cm = c * mask
    var = jnp.sum(cm * cm, axis=-1, keepdims=True) * inv_n   # biased (PyTorch)
    scale = gamma * jax.lax.rsqrt(var + BN_EPS)
    return jnp.maximum(c * scale + beta, 0.0)


def _plinear_dnn_kernel(xzT_ref, w_in_ref, w21_ref, ps_ref, out_ref, *, n):
    h2, h1 = w21_ref.shape
    npad = out_ref.shape[-1]

    # Lane mask for the true batch (padded lanes excluded from BN stats).
    lane = jax.lax.broadcasted_iota(jnp.int32, (1, npad), 1)
    mask = (lane < n).astype(jnp.float32)
    inv_n = 1.0 / float(n)

    act = xzT_ref[...]                                          # (r+p, Npad) f32

    # ---- fused block-diagonal input matmul:
    #   rows 0..h1-1 -> part2 layer-0 pre-activation (w20 @ Z^T)
    #   row  h1      -> part1 linear output          (w1  @ X^T)
    t = jnp.dot(w_in_ref[...], act, preferred_element_type=jnp.float32)
    y1 = t[h1:h1 + 1, :] + ps_ref[0:1, 0:1]                     # (1, Npad)
    h = t[0:h1, :] + ps_ref[0:h1, 1:2]                          # (h1, Npad)

    # ---- part2 hidden layer 0: BatchNorm1d (batch stats) + ReLU
    h = _bn_relu_masked(h, ps_ref[0:h1, 2:3], ps_ref[0:h1, 3:4], mask, inv_n)

    # ---- part2 hidden layer 1: Linear -> BatchNorm1d -> ReLU
    h = (jnp.dot(w21_ref[...], h, preferred_element_type=jnp.float32)
         + ps_ref[0:h2, 4:5])
    h = _bn_relu_masked(h, ps_ref[0:h2, 5:6], ps_ref[0:h2, 6:7], mask, inv_n)

    # ---- part2 output layer (no bias): y2 = w22 @ h, done as a lane-wise
    # multiply + sublane reduce so w22 rides inside the packed param slab.
    y2 = jnp.sum(ps_ref[0:h2, 7:8] * h, axis=0, keepdims=True)  # (1, Npad)

    # ---- single lane-dense output slab: row 0 = pred, row 1 = y1, row 2 = y2
    out_ref[...] = jnp.zeros_like(out_ref)
    out_ref[0:1, :] = y1 + y2
    out_ref[1:2, :] = y1
    out_ref[2:3, :] = y2


def partial_linear_dnn_forward(X, Z, params):
    """Returns (pred, y1_pred, y2_pred), each (N,) -- same as .squeeze() in torch."""
    X = jnp.asarray(X, jnp.float32)
    Z = jnp.asarray(Z, jnp.float32)
    n, r = X.shape
    p = Z.shape[1]
    h1 = params["w20"].shape[0]
    h2 = params["w21"].shape[0]
    npad = ((n + 127) // 128) * 128          # lane-dense batch axis

    # ---- input packing: batch on the lane axis, Z and X stacked on sublanes
    xz_t = jnp.concatenate([Z, X], axis=1).T                     # (p+r, n)
    xzT = jnp.pad(xz_t, ((0, 0), (0, npad - n)))                 # (p+r, Npad)

    # ---- block weight [[w20, 0], [0, w1]] (rows padded to a multiple of 8)
    rows_in = ((h1 + 1 + 7) // 8) * 8
    w_in = jnp.zeros((rows_in, p + r), jnp.float32)
    w_in = w_in.at[:h1, :p].set(params["w20"])                   # acts on Z rows
    w_in = w_in.at[h1, p:].set(params["w1"][0])                  # acts on X rows

    # ---- all small vector params packed into one slab (one DMA)
    prow = ((max(h1, h2) + 7) // 8) * 8
    ps = jnp.zeros((prow, 8), jnp.float32)
    ps = ps.at[0, 0].set(params["b1"][0])
    ps = ps.at[:h1, 1].set(params["b20"])
    ps = ps.at[:h1, 2].set(params["g0"])
    ps = ps.at[:h1, 3].set(params["be0"])
    ps = ps.at[:h2, 4].set(params["b21"])
    ps = ps.at[:h2, 5].set(params["g1"])
    ps = ps.at[:h2, 6].set(params["be1"])
    ps = ps.at[:h2, 7].set(params["w22"][0])

    inputs = (xzT, w_in, jnp.asarray(params["w21"], jnp.float32), ps)

    def spec(shape):
        nd = len(shape)
        return pl.BlockSpec(shape, lambda i, _nd=nd: (0,) * _nd)

    out = pl.pallas_call(
        functools.partial(_plinear_dnn_kernel, n=n),
        out_shape=jax.ShapeDtypeStruct((8, npad), jnp.float32),
        grid_spec=pl.GridSpec(
            grid=(1,),
            in_specs=[spec(a.shape) for a in inputs],
            out_specs=spec((8, npad)),
        ),
        compiler_params=pltpu.CompilerParams(
            dimension_semantics=("arbitrary",),
            vmem_limit_bytes=32 * 1024 * 1024),
    )(*inputs)

    pred = out[0, :n]
    y1 = out[1, :n]
    y2 = out[2, :n]
    return pred, y1, y2


def init_params(key, r, p, hidden=(32, 16)):
    """Deterministic init mimicking nn.Linear defaults + the __init__ rescalings."""
    k1, k2, k3, k4 = jax.random.split(key, 4)

    def linear_init(k, fan_out, fan_in, bias=True):
        bound = 1.0 / jnp.sqrt(jnp.float32(fan_in))
        kw, kb = jax.random.split(k)
        w = jax.random.uniform(kw, (fan_out, fan_in), jnp.float32, -bound, bound)
        b = (jax.random.uniform(kb, (fan_out,), jnp.float32, -bound, bound)
             if bias else None)
        return w, b

    h1, h2 = hidden

    # part1_layer = Linear(r, 1), weight rescaled so mean(|w|) == 0.004
    w1, b1 = linear_init(k1, 1, r)
    w1 = w1 * (0.004 / jnp.mean(jnp.abs(w1)))

    # part2_layers[0] = Linear(p, h1), rescaled so mean column L2 norm == 0.004
    w20, b20 = linear_init(k2, h1, p)
    w20 = w20 * (0.004 / jnp.mean(jnp.sqrt(jnp.sum(w20 ** 2, axis=0))))

    # part2_layers[1] = Linear(h1, h2); part2_layers[2] = Linear(h2, 1, bias=False)
    w21, b21 = linear_init(k3, h2, h1)
    w22, _ = linear_init(k4, 1, h2, bias=False)

    return dict(
        w1=w1, b1=b1,
        w20=w20, b20=b20,
        g0=jnp.ones((h1,), jnp.float32), be0=jnp.zeros((h1,), jnp.float32),
        w21=w21, b21=b21,
        g1=jnp.ones((h2,), jnp.float32), be1=jnp.zeros((h2,), jnp.float32),
        w22=w22,
    )


def _reference_forward(X, Z, params):
    """Pure-JAX reference of the PyTorch forward (training-mode BatchNorm)."""
    y1 = X @ params["w1"].T + params["b1"]                        # (n, 1)

    def bn_relu(h, g, b):
        mu = h.mean(axis=0)
        var = ((h - mu) ** 2).mean(axis=0)
        return jax.nn.relu((h - mu) / jnp.sqrt(var + BN_EPS) * g + b)

    h = bn_relu(Z @ params["w20"].T + params["b20"], params["g0"], params["be0"])
    h = bn_relu(h @ params["w21"].T + params["b21"], params["g1"], params["be1"])
    y2 = h @ params["w22"].T                                      # (n, 1)
    y1 = y1[:, 0]
    y2 = y2[:, 0]
    return y1 + y2, y1, y2


if __name__ == "__main__":
    r, p = 16, 16            # number of covariates for X and Z (small synthetic)
    hidden = (32, 16)
    n = 16                   # batch size

    key = jax.random.PRNGKey(0)
    kx, kz, kp = jax.random.split(key, 3)
    X = jax.random.normal(kx, (n, r), jnp.float32)
    Z = jax.random.normal(kz, (n, p), jnp.float32)
    params = init_params(kp, r, p, hidden)

    pred, y1_pred, y2_pred = partial_linear_dnn_forward(X, Z, params)
    jax.block_until_ready((pred, y1_pred, y2_pred))

    assert pred.shape == (n,) and y1_pred.shape == (n,) and y2_pred.shape == (n,)
    assert bool(jnp.all(jnp.isfinite(pred)))

    pred_ref, y1_ref, y2_ref = _reference_forward(X, Z, params)
    assert bool(jnp.allclose(y1_pred, y1_ref, atol=5e-2, rtol=5e-2))
    assert bool(jnp.allclose(y2_pred, y2_ref, atol=5e-2, rtol=5e-2))
    assert bool(jnp.allclose(pred, pred_ref, atol=5e-2, rtol=5e-2))

    print("KERNEL_OK")
</pallas_src>

<mosaic_0001>
module attributes {stable_mosaic.version = 11 : i64} {
  func.func @_plinear_dnn_kernel(%arg0: i32, %arg1: memref<32x128xf32, #tpu.memory_space<vmem>>, %arg2: memref<40x32xf32, #tpu.memory_space<vmem>>, %arg3: memref<16x32xf32, #tpu.memory_space<vmem>>, %arg4: memref<32x8xf32, #tpu.memory_space<vmem>>, %arg5: memref<8x128xf32, #tpu.memory_space<vmem>>) attributes {dimension_semantics = [#tpu.dimension_semantics<arbitrary>], iteration_bounds = array<i64: 1>, scalar_prefetch = 0 : i64, scratch_operands = 0 : i64, tpu.core_type = #tpu.core_type<tc>, window_params = [{pipeline_mode = #tpu.pipeline_mode<synchronous>, transform_indices = @transform_0, window_bounds = array<i64: 32, 128>}, {pipeline_mode = #tpu.pipeline_mode<synchronous>, transform_indices = @transform_1, window_bounds = array<i64: 40, 32>}, {pipeline_mode = #tpu.pipeline_mode<synchronous>, transform_indices = @transform_2, window_bounds = array<i64: 16, 32>}, {pipeline_mode = #tpu.pipeline_mode<synchronous>, transform_indices = @transform_3, window_bounds = array<i64: 32, 8>}, {pipeline_mode = #tpu.pipeline_mode<synchronous>, transform_indices = @transform_4, window_bounds = array<i64: 8, 128>}]} {
    %0 = tpu.iota {dimensions = array<i32: 1>} : vector<1x128xi32>
    %c16_i32 = arith.constant 16 : i32
    %1 = vector.broadcast %c16_i32 : i32 to vector<1x128xi32>
    %2 = arith.cmpi slt, %0, %1 : vector<1x128xi32>
    %3 = arith.extui %2 : vector<1x128xi1> to vector<1x128xi32>
    %4 = arith.sitofp %3 : vector<1x128xi32> to vector<1x128xf32>
    %c0 = arith.constant 0 : index
    %c0_0 = arith.constant 0 : index
    %5 = vector.load %arg1[%c0, %c0_0] : memref<32x128xf32, #tpu.memory_space<vmem>>, vector<32x128xf32>
    %c0_1 = arith.constant 0 : index
    %c0_2 = arith.constant 0 : index
    %6 = vector.load %arg2[%c0_1, %c0_2] : memref<40x32xf32, #tpu.memory_space<vmem>>, vector<40x32xf32>
    %cst = arith.constant dense<0.000000e+00> : vector<40x128xf32>
    %7 = tpu.matmul %6, %5, %cst {dimension_numbers = #tpu.dot_dimension_numbers<[1], [0], [0], [1], [0, 0, 1, 1], [], []>} : vector<40x32xf32>, vector<32x128xf32>, vector<40x128xf32> -> vector<40x128xf32>
    %8 = vector.extract_strided_slice %7 {offsets = [32, 0], sizes = [1, 128], strides = [1, 1]} : vector<40x128xf32> to vector<1x128xf32>
    %c0_3 = arith.constant 0 : index
    %c0_4 = arith.constant 0 : index
    %9 = vector.load %arg4[%c0_3, %c0_4] : memref<32x8xf32, #tpu.memory_space<vmem>>, vector<1x1xf32>
    %10 = vector.broadcast %9 : vector<1x1xf32> to vector<1x128xf32>
    %11 = arith.addf %8, %10 : vector<1x128xf32>
    %12 = vector.extract_strided_slice %7 {offsets = [0, 0], sizes = [32, 128], strides = [1, 1]} : vector<40x128xf32> to vector<32x128xf32>
    %c0_5 = arith.constant 0 : index
    %c1 = arith.constant 1 : index
    %13 = vector.load %arg4[%c0_5, %c1] : memref<32x8xf32, #tpu.memory_space<vmem>>, vector<32x1xf32>
    %14 = vector.broadcast %13 : vector<32x1xf32> to vector<32x128xf32>
    %15 = arith.addf %12, %14 : vector<32x128xf32>
    %c0_6 = arith.constant 0 : index
    %c2 = arith.constant 2 : index
    %16 = vector.load %arg4[%c0_6, %c2] : memref<32x8xf32, #tpu.memory_space<vmem>>, vector<32x1xf32>
    %c0_7 = arith.constant 0 : index
    %c3 = arith.constant 3 : index
    %17 = vector.load %arg4[%c0_7, %c3] : memref<32x8xf32, #tpu.memory_space<vmem>>, vector<32x1xf32>
    %18 = vector.broadcast %4 : vector<1x128xf32> to vector<32x128xf32>
    %19 = arith.mulf %15, %18 : vector<32x128xf32>
    %cst_8 = arith.constant dense<0.000000e+00> : vector<32xf32>
    %20 = vector.multi_reduction <add>, %19, %cst_8 [1] : vector<32x128xf32> to vector<32xf32>
    %21 = vector.shape_cast %20 : vector<32xf32> to vector<32x1xf32>
    %cst_9 = arith.constant 6.250000e-02 : f32
    %22 = vector.broadcast %cst_9 : f32 to vector<32x1xf32>
    %23 = arith.mulf %21, %22 : vector<32x1xf32>
    %24 = vector.broadcast %23 : vector<32x1xf32> to vector<32x128xf32>
    %25 = arith.subf %15, %24 : vector<32x128xf32>
    %26 = vector.broadcast %4 : vector<1x128xf32> to vector<32x128xf32>
    %27 = arith.mulf %25, %26 : vector<32x128xf32>
    %28 = arith.mulf %27, %27 : vector<32x128xf32>
    %cst_10 = arith.constant dense<0.000000e+00> : vector<32xf32>
    %29 = vector.multi_reduction <add>, %28, %cst_10 [1] : vector<32x128xf32> to vector<32xf32>
    %30 = vector.shape_cast %29 : vector<32xf32> to vector<32x1xf32>
    %cst_11 = arith.constant 6.250000e-02 : f32
    %31 = vector.broadcast %cst_11 : f32 to vector<32x1xf32>
    %32 = arith.mulf %30, %31 : vector<32x1xf32>
    %cst_12 = arith.constant 9.99999974E-6 : f32
    %33 = vector.broadcast %cst_12 : f32 to vector<32x1xf32>
    %34 = arith.addf %32, %33 : vector<32x1xf32>
    %35 = math.rsqrt %34 : vector<32x1xf32>
    %36 = arith.mulf %16, %35 : vector<32x1xf32>
    %37 = vector.broadcast %36 : vector<32x1xf32> to vector<32x128xf32>
    %38 = arith.mulf %25, %37 : vector<32x128xf32>
    %39 = vector.broadcast %17 : vector<32x1xf32> to vector<32x128xf32>
    %40 = arith.addf %38, %39 : vector<32x128xf32>
    %cst_13 = arith.constant 0.000000e+00 : f32
    %41 = vector.broadcast %cst_13 : f32 to vector<32x128xf32>
    %42 = arith.maximumf %40, %41 : vector<32x128xf32>
    %c0_14 = arith.constant 0 : index
    %c0_15 = arith.constant 0 : index
    %43 = vector.load %arg3[%c0_14, %c0_15] : memref<16x32xf32, #tpu.memory_space<vmem>>, vector<16x32xf32>
    %cst_16 = arith.constant dense<0.000000e+00> : vector<16x128xf32>
    %44 = tpu.matmul %43, %42, %cst_16 {dimension_numbers = #tpu.dot_dimension_numbers<[1], [0], [0], [1], [0, 0, 1, 1], [], []>} : vector<16x32xf32>, vector<32x128xf32>, vector<16x128xf32> -> vector<16x128xf32>
    %c0_17 = arith.constant 0 : index
    %c4 = arith.constant 4 : index
    %45 = vector.load %arg4[%c0_17, %c4] : memref<32x8xf32, #tpu.memory_space<vmem>>, vector<16x1xf32>
    %46 = vector.broadcast %45 : vector<16x1xf32> to vector<16x128xf32>
    %47 = arith.addf %44, %46 : vector<16x128xf32>
    %c0_18 = arith.constant 0 : index
    %c5 = arith.constant 5 : index
    %48 = vector.load %arg4[%c0_18, %c5] : memref<32x8xf32, #tpu.memory_space<vmem>>, vector<16x1xf32>
    %c0_19 = arith.constant 0 : index
    %c6 = arith.constant 6 : index
    %49 = vector.load %arg4[%c0_19, %c6] : memref<32x8xf32, #tpu.memory_space<vmem>>, vector<16x1xf32>
    %50 = vector.broadcast %4 : vector<1x128xf32> to vector<16x128xf32>
    %51 = arith.mulf %47, %50 : vector<16x128xf32>
    %cst_20 = arith.constant dense<0.000000e+00> : vector<16xf32>
    %52 = vector.multi_reduction <add>, %51, %cst_20 [1] : vector<16x128xf32> to vector<16xf32>
    %53 = vector.shape_cast %52 : vector<16xf32> to vector<16x1xf32>
    %cst_21 = arith.constant 6.250000e-02 : f32
    %54 = vector.broadcast %cst_21 : f32 to vector<16x1xf32>
    %55 = arith.mulf %53, %54 : vector<16x1xf32>
    %56 = vector.broadcast %55 : vector<16x1xf32> to vector<16x128xf32>
    %57 = arith.subf %47, %56 : vector<16x128xf32>
    %58 = vector.broadcast %4 : vector<1x128xf32> to vector<16x128xf32>
    %59 = arith.mulf %57, %58 : vector<16x128xf32>
    %60 = arith.mulf %59, %59 : vector<16x128xf32>
    %cst_22 = arith.constant dense<0.000000e+00> : vector<16xf32>
    %61 = vector.multi_reduction <add>, %60, %cst_22 [1] : vector<16x128xf32> to vector<16xf32>
    %62 = vector.shape_cast %61 : vector<16xf32> to vector<16x1xf32>
    %cst_23 = arith.constant 6.250000e-02 : f32
    %63 = vector.broadcast %cst_23 : f32 to vector<16x1xf32>
    %64 = arith.mulf %62, %63 : vector<16x1xf32>
    %cst_24 = arith.constant 9.99999974E-6 : f32
    %65 = vector.broadcast %cst_24 : f32 to vector<16x1xf32>
    %66 = arith.addf %64, %65 : vector<16x1xf32>
    %67 = math.rsqrt %66 : vector<16x1xf32>
    %68 = arith.mulf %48, %67 : vector<16x1xf32>
    %69 = vector.broadcast %68 : vector<16x1xf32> to vector<16x128xf32>
    %70 = arith.mulf %57, %69 : vector<16x128xf32>
    %71 = vector.broadcast %49 : vector<16x1xf32> to vector<16x128xf32>
    %72 = arith.addf %70, %71 : vector<16x128xf32>
    %cst_25 = arith.constant 0.000000e+00 : f32
    %73 = vector.broadcast %cst_25 : f32 to vector<16x128xf32>
    %74 = arith.maximumf %72, %73 : vector<16x128xf32>
    %c0_26 = arith.constant 0 : index
    %c7 = arith.constant 7 : index
    %75 = vector.load %arg4[%c0_26, %c7] : memref<32x8xf32, #tpu.memory_space<vmem>>, vector<16x1xf32>
    %76 = vector.broadcast %75 : vector<16x1xf32> to vector<16x128xf32>
    %77 = arith.mulf %76, %74 : vector<16x128xf32>
    %cst_27 = arith.constant dense<0.000000e+00> : vector<128xf32>
    %78 = vector.multi_reduction <add>, %77, %cst_27 [0] : vector<16x128xf32> to vector<128xf32>
    %79 = vector.shape_cast %78 : vector<128xf32> to vector<1x128xf32>
    %cst_28 = arith.constant 0.000000e+00 : f32
    %80 = vector.broadcast %cst_28 : f32 to vector<8x128xf32>
    %c0_29 = arith.constant 0 : index
    %c0_30 = arith.constant 0 : index
    %81 = vector.load %arg5[%c0_29, %c0_30] : memref<8x128xf32, #tpu.memory_space<vmem>>, vector<8x128xf32>
    tpu.vector_store %arg5[%c0_29, %c0_30], %80 {strides = array<i32>} : memref<8x128xf32, #tpu.memory_space<vmem>>, vector<8x128xf32>,
    %82 = arith.addf %11, %79 : vector<1x128xf32>
    %c0_31 = arith.constant 0 : index
    %c0_32 = arith.constant 0 : index
    %83 = vector.load %arg5[%c0_31, %c0_32] : memref<8x128xf32, #tpu.memory_space<vmem>>, vector<1x128xf32>
    tpu.vector_store %arg5[%c0_31, %c0_32], %82 {strides = array<i32>} : memref<8x128xf32, #tpu.memory_space<vmem>>, vector<1x128xf32>,
    %c1_33 = arith.constant 1 : index
    %c0_34 = arith.constant 0 : index
    %84 = vector.load %arg5[%c1_33, %c0_34] : memref<8x128xf32, #tpu.memory_space<vmem>>, vector<1x128xf32>
    tpu.vector_store %arg5[%c1_33, %c0_34], %11 {strides = array<i32>} : memref<8x128xf32, #tpu.memory_space<vmem>>, vector<1x128xf32>,
    %c2_35 = arith.constant 2 : index
    %c0_36 = arith.constant 0 : index
    %85 = vector.load %arg5[%c2_35, %c0_36] : memref<8x128xf32, #tpu.memory_space<vmem>>, vector<1x128xf32>
    tpu.vector_store %arg5[%c2_35, %c0_36], %79 {strides = array<i32>} : memref<8x128xf32, #tpu.memory_space<vmem>>, vector<1x128xf32>,
    return
  }
  func.func @transform_0(%arg0: i32) -> (i32, i32) {
    %c0_i32 = arith.constant 0 : i32
    %c0_i32_0 = arith.constant 0 : i32
    %c0_i32_1 = arith.constant 0 : i32
    return %c0_i32, %c0_i32_0 : i32, i32
  }
  func.func @transform_1(%arg0: i32) -> (i32, i32) {
    %c0_i32 = arith.constant 0 : i32
    %c0_i32_0 = arith.constant 0 : i32
    %c0_i32_1 = arith.constant 0 : i32
    return %c0_i32, %c0_i32_0 : i32, i32
  }
  func.func @transform_2(%arg0: i32) -> (i32, i32) {
    %c0_i32 = arith.constant 0 : i32
    %c0_i32_0 = arith.constant 0 : i32
    %c0_i32_1 = arith.constant 0 : i32
    return %c0_i32, %c0_i32_0 : i32, i32
  }
  func.func @transform_3(%arg0: i32) -> (i32, i32) {
    %c0_i32 = arith.constant 0 : i32
    %c0_i32_0 = arith.constant 0 : i32
    %c0_i32_1 = arith.constant 0 : i32
    return %c0_i32, %c0_i32_0 : i32, i32
  }
  func.func @transform_4(%arg0: i32) -> (i32, i32) {
    %c0_i32 = arith.constant 0 : i32
    %c0_i32_0 = arith.constant 0 : i32
    %c0_i32_1 = arith.constant 0 : i32
    return %c0_i32, %c0_i32_0 : i32, i32
  }
}

</mosaic_0001>

<llo_original>
// kernel: tpu_custom_call.1
$region0: #{tpu_custom_call.1}
  #allocation0 [shape = 'u32[]', space=smem, size = 0x4, offset = 0x4, fixed_abs, tag = 'smem constant byte address 0x4 - core index']
  #allocation1 [shape = 'u32[144,128]{1,0:T(1,128)}', space=vmem, size = 0x12000, scoped, tag = 'internal scratch']
  %s0 = inlined_call_operand.vmem [shape: f32[32,128], index: 0, kind: input, shape index: {}]
  %s1 = inlined_call_operand.vmem [shape: f32[40,32], index: 1, kind: input, shape index: {}]
  %s2 = inlined_call_operand.vmem [shape: f32[16,32], index: 2, kind: input, shape index: {}]
  %s3 = inlined_call_operand.vmem [shape: f32[32,8], index: 3, kind: input, shape index: {}]
  %s4 = inlined_call_operand.hbm [shape: f32[8,128], index: 4, kind: output, shape index: {}]
  %s5 = sld [smem:[#allocation0]]
  $region26: #{tpu_custom_call.1} parent=0
    _
  %s7 = ssub.s32 1, %s5
  %s8 = scalar_select 0, %s7, %s5
  $region1: #{tpu_custom_call.1} parent=0
    #allocation2 [shape = 'u8[4096]{0}', space=vmem, size = 0x1000, scoped, tag = 'output window, operand 0, single buffered']
    #allocation3 [shape = 's32[1]{0}', space=sflag, size = 0x4, scoped, tag = 'scoped memory for tpu_custom_call.1']
    %9 = vsyncpa [#allocation3], 0
    // Predicated region
    $region2: #{tpu_custom_call.1} parent=1 // pred_check
      _
    $region3: #{tpu_custom_call.1} parent=1 // pred_check_branch
      %11 = sbr.rel (0) target = $region5
    $region4: #{tpu_custom_call.1} parent=1 // pred_region
      _
    $region5: #{tpu_custom_call.1} parent=1 // pred_fallthru
      _
    // Predicated region
    $region6: #{tpu_custom_call.1} parent=1 // pred_check
      _
    $region7: #{tpu_custom_call.1} parent=1 // pred_check_branch
      %13 = sbr.rel (0) target = $region9
    $region8: #{tpu_custom_call.1} parent=1 // pred_region
      _
    $region9: #{tpu_custom_call.1} parent=1 // pred_fallthru
      _
    // Predicated region
    $region10: #{tpu_custom_call.1} parent=1 // pred_check
      _
    $region11: #{tpu_custom_call.1} parent=1 // pred_check_branch
      %15 = sbr.rel (0) target = $region13
    $region12: #{tpu_custom_call.1} parent=1 // pred_region
      _
    $region13: #{tpu_custom_call.1} parent=1 // pred_fallthru
      _
    // Predicated region
    $region14: #{tpu_custom_call.1} parent=1 // pred_check
      _
    $region15: #{tpu_custom_call.1} parent=1 // pred_check_branch
      %17 = sbr.rel (0) target = $region17
    $region16: #{tpu_custom_call.1} parent=1 // pred_region
      _
    $region17: #{tpu_custom_call.1} parent=1 // pred_fallthru
      _
    %v18 = vlaneseq
    %v19 = vand.u32 %v18, 127
    %vm20 = vcmp.lt.s32.totalorder %v19, 16
    %v21 = vsel %vm20, 1, 0
    %v22 = vcvt.s32.f32 %v21
    %v23 = vld [vmem:[%s0] sm:$0xff]
    %v24 = vld [vmem:[%s0 + $0x8] sm:$0xff]
    %v25 = vld [vmem:[%s0 + $0x10] sm:$0xff]
    %v26 = vld [vmem:[%s0 + $0x18] sm:$0xff]
    %v27 = vld [vmem:[%s1] sm:$0xff]
    %v28 = vld [vmem:[%s1 + $0x8] sm:$0xff]
    %v29 = vld [vmem:[%s1 + $0x10] sm:$0xff]
    %v30 = vld [vmem:[%s1 + $0x18] sm:$0xff]
    %v31 = vld [vmem:[%s1 + $0x20] sm:$0xff]
    %vm32 = vcmask 261120
    %v34 = vsel %vm32, %v27, 0
    %v37 = vsel %vm32, %v28, 0
    %v40 = vsel %vm32, %v29, 0
    %v43 = vsel %vm32, %v30, 0
    %v46 = vsel %vm32, %v31, 0
    %48 = vmatprep.subr.mxu0 0.0
    %49 = vmatpush1.msra.mxu0 0.0
    %50 = vmatprep.subr.mxu0 0.0
    %51 = vmatpush1.msra.mxu0 0.0
    %52 = vmatprep.subr.mxu0 0.0
    %53 = vmatpush1.msra.mxu0 0.0
    %54 = vmatprep.subr.mxu0 0.0
    %55 = vmatpush1.msra.mxu0 0.0
    %56 = vmatprep.subr.mxu0 0.0
    %57 = vmatpush1.msra.mxu0 0.0
    %58 = vmatprep.subr.mxu0 0.0
    %59 = vmatpush1.msra.mxu0 0.0
    %60 = vmatprep.subr.mxu0 0.0
    %61 = vmatpush1.msra.mxu0 0.0
    %62 = vmatprep.subr.mxu0 0.0
    %63 = vmatpush1.msra.mxu0 0.0
    %64 = vmatprep.subr.mxu0 0.0
    %65 = vmatpush1.msra.mxu0 0.0
    %66 = vmatprep.subr.mxu0 0.0
    %67 = vmatpush1.msra.mxu0 0.0
    %68 = vmatprep.subr.mxu0 0.0
    %69 = vmatpush1.msra.mxu0 0.0
    %70 = vmatprep.subr.mxu0 0.0
    %71 = vmatpush1.msra.mxu0 0.0
    %72 = vmatprep.subr.mxu0 0.0
    %73 = vmatpush1.msra.mxu0 %v26
    %74 = vmatprep.subr.mxu0 0.0
    %75 = vmatpush1.msra.mxu0 %v25
    %76 = vmatprep.subr.mxu0 0.0
    %77 = vmatpush1.msra.mxu0 %v24
    %78 = vmatprep.subr.mxu0 0.0
    %79 = vmatpush1.msra.mxu0 %v23
    %80 = vmatprep.subr.mxu0 0.0
    %81 = vmatpush2.msra.mxu0 0.0
    %82 = vmatprep.subr.mxu0 0.0
    %83 = vmatpush2.msra.mxu0 0.0
    %84 = vmatprep.subr.mxu0 0.0
    %85 = vmatpush2.msra.mxu0 0.0
    %86 = vmatprep.subr.mxu0 0.0
    %87 = vmatpush2.msra.mxu0 0.0
    %88 = vmatprep.subr.mxu0 0.0
    %89 = vmatpush2.msra.mxu0 0.0
    %90 = vmatprep.subr.mxu0 0.0
    %91 = vmatpush2.msra.mxu0 0.0
    %92 = vmatprep.subr.mxu0 0.0
    %93 = vmatpush2.msra.mxu0 0.0
    %94 = vmatprep.subr.mxu0 0.0
    %95 = vmatpush2.msra.mxu0 0.0
    %96 = vmatprep.subr.mxu0 0.0
    %97 = vmatpush2.msra.mxu0 0.0
    %98 = vmatprep.subr.mxu0 0.0
    %99 = vmatpush2.msra.mxu0 0.0
    %100 = vmatprep.subr.mxu0 0.0
    %101 = vmatpush2.msra.mxu0 0.0
    %102 = vmatprep.subr.mxu0 0.0
    %103 = vmatpush2.msra.mxu0 0.0
    %104 = vmatprep.subr.mxu0 0.0
    %105 = vmatpush2.msra.mxu0 0.0
    %106 = vmatprep.subr.mxu0 0.0
    %107 = vmatpush2.msra.mxu0 0.0
    %108 = vmatprep.subr.mxu0 0.0
    %109 = vmatpush2.msra.mxu0 0.0
    %110 = vmatprep.subr.mxu0 0.0
    %111 = vmatpush2.msra.mxu0 0.0
    %112 = vmatprep.mubr.f32.mxu0 0.0
    %113 = vmatmul.mubr.f32.gmra.mxu0 %v34
    %v114 = vpop.f32.mrf.mxu0
    %v115 = vadd.f32 0.0, %v114
    %v116 = vpop.f32.mrf.mxu0
    %117 = vmatprep.mubr.f32.mxu0 0.0
    %118 = vmatmul.mubr.f32.gmra.mxu0 %v37
    %v119 = vpop.f32.mrf.mxu0
    %v120 = vadd.f32 0.0, %v119
    %v121 = vpop.f32.mrf.mxu0
    %122 = vmatprep.mubr.f32.mxu0 0.0
    %123 = vmatmul.mubr.f32.gmra.mxu0 %v40
    %v124 = vpop.f32.mrf.mxu0
    %v125 = vadd.f32 0.0, %v124
    %v126 = vpop.f32.mrf.mxu0
    %127 = vmatprep.mubr.f32.mxu0 0.0
    %128 = vmatmul.mubr.f32.gmra.mxu0 %v43
    %v129 = vpop.f32.mrf.mxu0
    %v130 = vadd.f32 0.0, %v129
    %v131 = vpop.f32.mrf.mxu0
    %132 = vmatprep.mubr.f32.mxu0 0.0
    %133 = vmatmul.mubr.f32.gmra.mxu0 %v46
    %v134 = vpop.f32.mrf.mxu0
    %v135 = vadd.f32 0.0, %v134
    %v136 = vpop.f32.mrf.mxu0
    %137 = vdwg.mxu0
    %v138 = vld [vmem:[%s3] sm:$0x1]
    %140 = vset.pattern.permute.xlu0 0
    %141 = vperm.xlu0 %140, %v138
    %v142 = vpop.permute.xlu0 %141
    %v144 = vadd.f32 %v135, %v142
    %v145 = vld [vmem:[%s3] sm:$0xff]
    %v146 = vld [vmem:[%s3 + $0x8] sm:$0xff]
    %v147 = vld [vmem:[%s3 + $0x10] sm:$0xff]
    %v148 = vld [vmem:[%s3 + $0x18] sm:$0xff]
    %150 = vset.pattern.permute.xlu0 1
    %151 = vperm.xlu0 %150, %v145
    %v152 = vpop.permute.xlu0 %151
    %155 = vset.pattern.permute.xlu0 1
    %156 = vperm.xlu0 %155, %v146
    %v157 = vpop.permute.xlu0 %156
    %160 = vset.pattern.permute.xlu0 1
    %161 = vperm.xlu0 %160, %v147
    %v162 = vpop.permute.xlu0 %161
    %165 = vset.pattern.permute.xlu0 1
    %166 = vperm.xlu0 %165, %v148
    %v167 = vpop.permute.xlu0 %166
    %v169 = vadd.f32 %v115, %v152
    %v170 = vadd.f32 %v120, %v157
    %v171 = vadd.f32 %v125, %v162
    %v172 = vadd.f32 %v130, %v167
    %v173 = vmul.f32 %v169, %v22
    %v174 = vmul.f32 %v170, %v22
    %v175 = vmul.f32 %v171, %v22
    %v176 = vmul.f32 %v172, %v22
    %177 = vadd.xlane.f32.xlu0 %v173
    %v178 = vpop.xlane.xlu0 %177
    %179 = vadd.xlane.f32.xlu0 %v174
    %v180 = vpop.xlane.xlu0 %179
    %181 = vadd.xlane.f32.xlu0 %v175
    %v182 = vpop.xlane.xlu0 %181
    %183 = vadd.xlane.f32.xlu0 %v176
    %v184 = vpop.xlane.xlu0 %183
    %v185 = vmul.f32 %v178, 0.0625
    %v186 = vmul.f32 %v180, 0.0625
    %v187 = vmul.f32 %v182, 0.0625
    %v188 = vmul.f32 %v184, 0.0625
    %v189 = vsub.f32 %v169, %v185
    %v190 = vsub.f32 %v170, %v186
    %v191 = vsub.f32 %v171, %v187
    %v192 = vsub.f32 %v172, %v188
    %v193 = vmul.f32 %v189, %v22
    %v194 = vmul.f32 %v190, %v22
    %v195 = vmul.f32 %v191, %v22
    %v196 = vmul.f32 %v192, %v22
    %v197 = vmul.f32 %v193, %v193
    %v198 = vmul.f32 %v194, %v194
    %v199 = vmul.f32 %v195, %v195
    %v200 = vmul.f32 %v196, %v196
    %201 = vadd.xlane.f32.xlu0 %v197
    %v202 = vpop.xlane.xlu0 %201
    %203 = vadd.xlane.f32.xlu0 %v198
    %v204 = vpop.xlane.xlu0 %203
    %205 = vadd.xlane.f32.xlu0 %v199
    %v206 = vpop.xlane.xlu0 %205
    %207 = vadd.xlane.f32.xlu0 %v200
    %v208 = vpop.xlane.xlu0 %207
    %v209 = vmul.f32 %v202, 0.0625
    %v210 = vmul.f32 %v204, 0.0625
    %v211 = vmul.f32 %v206, 0.0625
    %v212 = vmul.f32 %v208, 0.0625
    %v213 = vadd.f32 %v209, 1e-05
    %v214 = vadd.f32 %v210, 1e-05
    %v215 = vadd.f32 %v211, 1e-05
    %v216 = vadd.f32 %v212, 1e-05
    %v217 = vrsqrt.pop %v213
    %v218 = vrsqrt.pop %v214
    %v219 = vrsqrt.pop %v215
    %v220 = vrsqrt.pop %v216
    %v221 = vmul.f32 %v145, %v217
    %v222 = vmul.f32 %v146, %v218
    %v223 = vmul.f32 %v147, %v219
    %v224 = vmul.f32 %v148, %v220
    %226 = vset.pattern.permute.xlu0 2
    %227 = vperm.xlu0 %226, %v221
    %v228 = vpop.permute.xlu0 %227
    %231 = vset.pattern.permute.xlu0 2
    %232 = vperm.xlu0 %231, %v222
    %v233 = vpop.permute.xlu0 %232
    %236 = vset.pattern.permute.xlu0 2
    %237 = vperm.xlu0 %236, %v223
    %v238 = vpop.permute.xlu0 %237
    %241 = vset.pattern.permute.xlu0 2
    %242 = vperm.xlu0 %241, %v224
    %v243 = vpop.permute.xlu0 %242
    %v245 = vmul.f32 %v189, %v228
    %v246 = vmul.f32 %v190, %v233
    %v247 = vmul.f32 %v191, %v238
    %v248 = vmul.f32 %v192, %v243
    %249 = vset.pattern.permute.xlu0 3
    %250 = vperm.xlu0 %249, %v145
    %v251 = vpop.permute.xlu0 %250
    %253 = vset.pattern.permute.xlu0 3
    %254 = vperm.xlu0 %253, %v146
    %v255 = vpop.permute.xlu0 %254
    %257 = vset.pattern.permute.xlu0 3
    %258 = vperm.xlu0 %257, %v147
    %v259 = vpop.permute.xlu0 %258
    %261 = vset.pattern.permute.xlu0 3
    %262 = vperm.xlu0 %261, %v148
    %v263 = vpop.permute.xlu0 %262
    %v265 = vadd.f32 %v245, %v251
    %v266 = vadd.f32 %v246, %v255
    %v267 = vadd.f32 %v247, %v259
    %v268 = vadd.f32 %v248, %v263
    %v269 = vmax.f32 %v265, 0.0
    %v270 = vmax.f32 %v266, 0.0
    %v271 = vmax.f32 %v267, 0.0
    %v272 = vmax.f32 %v268, 0.0
    %v273 = vld [vmem:[%s2] sm:$0xff]
    %v274 = vld [vmem:[%s2 + $0x8] sm:$0xff]
    %v275 = vld [vmem:[%s3] sm:$0xff]
    %v276 = vld [vmem:[%s3 + $0x8] sm:$0xff]
    %278 = vset.pattern.permute.xlu0 4
    %279 = vperm.xlu0 %278, %v275
    %v280 = vpop.permute.xlu0 %279
    %283 = vset.pattern.permute.xlu0 4
    %284 = vperm.xlu0 %283, %v276
    %v285 = vpop.permute.xlu0 %284
    %v288 = vsel %vm32, %v273, 0
    %v291 = vsel %vm32, %v274, 0
    %293 = vmatprep.subr.mxu0 0.0
    %294 = vmatpush1.msra.mxu0 0.0
    %295 = vmatprep.subr.mxu0 0.0
    %296 = vmatpush1.msra.mxu0 0.0
    %297 = vmatprep.subr.mxu0 0.0
    %298 = vmatpush1.msra.mxu0 0.0
    %299 = vmatprep.subr.mxu0 0.0
    %300 = vmatpush1.msra.mxu0 0.0
    %301 = vmatprep.subr.mxu0 0.0
    %302 = vmatpush1.msra.mxu0 0.0
    %303 = vmatprep.subr.mxu0 0.0
    %304 = vmatpush1.msra.mxu0 0.0
    %305 = vmatprep.subr.mxu0 0.0
    %306 = vmatpush1.msra.mxu0 0.0
    %307 = vmatprep.subr.mxu0 0.0
    %308 = vmatpush1.msra.mxu0 0.0
    %309 = vmatprep.subr.mxu0 0.0
    %310 = vmatpush1.msra.mxu0 0.0
    %311 = vmatprep.subr.mxu0 0.0
    %312 = vmatpush1.msra.mxu0 0.0
    %313 = vmatprep.subr.mxu0 0.0
    %314 = vmatpush1.msra.mxu0 0.0
    %315 = vmatprep.subr.mxu0 0.0
    %316 = vmatpush1.msra.mxu0 0.0
    %317 = vmatprep.subr.mxu0 0.0
    %318 = vmatpush1.msra.mxu0 %v272
    %319 = vmatprep.subr.mxu0 0.0
    %320 = vmatpush1.msra.mxu0 %v271
    %321 = vmatprep.subr.mxu0 0.0
    %322 = vmatpush1.msra.mxu0 %v270
    %323 = vmatprep.subr.mxu0 0.0
    %324 = vmatpush1.msra.mxu0 %v269
    %325 = vmatprep.subr.mxu0 0.0
    %326 = vmatpush2.msra.mxu0 0.0
    %327 = vmatprep.subr.mxu0 0.0
    %328 = vmatpush2.msra.mxu0 0.0
    %329 = vmatprep.subr.mxu0 0.0
    %330 = vmatpush2.msra.mxu0 0.0
    %331 = vmatprep.subr.mxu0 0.0
    %332 = vmatpush2.msra.mxu0 0.0
    %333 = vmatprep.subr.mxu0 0.0
    %334 = vmatpush2.msra.mxu0 0.0
    %335 = vmatprep.subr.mxu0 0.0
    %336 = vmatpush2.msra.mxu0 0.0
    %337 = vmatprep.subr.mxu0 0.0
    %338 = vmatpush2.msra.mxu0 0.0
    %339 = vmatprep.subr.mxu0 0.0
    %340 = vmatpush2.msra.mxu0 0.0
    %341 = vmatprep.subr.mxu0 0.0
    %342 = vmatpush2.msra.mxu0 0.0
    %343 = vmatprep.subr.mxu0 0.0
    %344 = vmatpush2.msra.mxu0 0.0
    %345 = vmatprep.subr.mxu0 0.0
    %346 = vmatpush2.msra.mxu0 0.0
    %347 = vmatprep.subr.mxu0 0.0
    %348 = vmatpush2.msra.mxu0 0.0
    %349 = vmatprep.subr.mxu0 0.0
    %350 = vmatpush2.msra.mxu0 0.0
    %351 = vmatprep.subr.mxu0 0.0
    %352 = vmatpush2.msra.mxu0 0.0
    %353 = vmatprep.subr.mxu0 0.0
    %354 = vmatpush2.msra.mxu0 0.0
    %355 = vmatprep.subr.mxu0 0.0
    %356 = vmatpush2.msra.mxu0 0.0
    %357 = vmatprep.mubr.f32.mxu0 0.0
    %358 = vmatmul.mubr.f32.gmra.mxu0 %v288
    %v359 = vpop.f32.mrf.mxu0
    %v360 = vadd.f32 %v280, %v359
    %v361 = vpop.f32.mrf.mxu0
    %362 = vmatprep.mubr.f32.mxu0 0.0
    %363 = vmatmul.mubr.f32.gmra.mxu0 %v291
    %v364 = vpop.f32.mrf.mxu0
    %v365 = vadd.f32 %v285, %v364
    %v366 = vpop.f32.mrf.mxu0
    %367 = vdwg.mxu0
    %v368 = vmul.f32 %v360, %v22
    %v369 = vmul.f32 %v365, %v22
    %370 = vadd.xlane.f32.xlu0 %v368
    %v371 = vpop.xlane.xlu0 %370
    %372 = vadd.xlane.f32.xlu0 %v369
    %v373 = vpop.xlane.xlu0 %372
    %v374 = vmul.f32 %v371, 0.0625
    %v375 = vmul.f32 %v373, 0.0625
    %v376 = vsub.f32 %v360, %v374
    %v377 = vsub.f32 %v365, %v375
    %v378 = vmul.f32 %v376, %v22
    %v379 = vmul.f32 %v377, %v22
    %v380 = vmul.f32 %v378, %v378
    %v381 = vmul.f32 %v379, %v379
    %382 = vadd.xlane.f32.xlu0 %v380
    %v383 = vpop.xlane.xlu0 %382
    %384 = vadd.xlane.f32.xlu0 %v381
    %v385 = vpop.xlane.xlu0 %384
    %v386 = vmul.f32 %v383, 0.0625
    %v387 = vmul.f32 %v385, 0.0625
    %v388 = vadd.f32 %v386, 1e-05
    %v389 = vadd.f32 %v387, 1e-05
    %v390 = vrsqrt.pop %v388
    %v391 = vrsqrt.pop %v389
    %v392 = vmul.f32 %v275, %v390
    %v393 = vmul.f32 %v276, %v391
    %395 = vset.pattern.permute.xlu0 5
    %396 = vperm.xlu0 %395, %v392
    %v397 = vpop.permute.xlu0 %396
    %400 = vset.pattern.permute.xlu0 5
    %401 = vperm.xlu0 %400, %v393
    %v402 = vpop.permute.xlu0 %401
    %v404 = vmul.f32 %v376, %v397
    %v405 = vmul.f32 %v377, %v402
    %406 = vset.pattern.permute.xlu0 6
    %407 = vperm.xlu0 %406, %v275
    %v408 = vpop.permute.xlu0 %407
    %410 = vset.pattern.permute.xlu0 6
    %411 = vperm.xlu0 %410, %v276
    %v412 = vpop.permute.xlu0 %411
    %v414 = vadd.f32 %v404, %v408
    %v415 = vadd.f32 %v405, %v412
    %v416 = vmax.f32 %v414, 0.0
    %v417 = vmax.f32 %v415, 0.0
    %418 = vset.pattern.permute.xlu0 7
    %419 = vperm.xlu0 %418, %v275
    %v420 = vpop.permute.xlu0 %419
    %422 = vset.pattern.permute.xlu0 7
    %423 = vperm.xlu0 %422, %v276
    %v424 = vpop.permute.xlu0 %423
    %v426 = vmul.f32 %v420, %v416
    %v427 = vmul.f32 %v424, %v417
    %v428 = vadd.f32 %v426, %v427
    %v429 = vrot.slane %v428, 4
    %v430 = vadd.f32 %v428, %v429
    %v431 = vrot.slane %v430, 2
    %v432 = vadd.f32 %v430, %v431
    %v433 = vrot.slane %v432, 1
    %v434 = vadd.f32 %v432, %v433
    %435 = vst [vmem:[#allocation2] sm:$0xff] 0.0
    %v436 = vadd.f32 %v144, %v434
    %437 = vst [vmem:[#allocation2] sm:$0x1] %v436
    %438 = vst [vmem:[#allocation2 + $0x1] sm:$0x1] %v144
    %439 = vst [vmem:[#allocation2 + $0x2] sm:$0x1] %v434
    // Predicated region
    $region18: #{tpu_custom_call.1} parent=1 // pred_check
      _
    $region19: #{tpu_custom_call.1} parent=1 // pred_check_branch
      %441 = sbr.rel (0) target = $region21
    $region20: #{tpu_custom_call.1} parent=1 // pred_region
      %s443 = ssub.s32 128, 128
      %444 = vsyncadd [#allocation3], %s443
      %s446 = sshll.u32 [#allocation2], 4
      %s447 = int_to_ptr.vmem [resolvable:$true] %s446
      %449 = dma.vmem_to_hbm [thread:$0]  %s447, 128, %s4, [#allocation3]
    $region21: #{tpu_custom_call.1} parent=1 // pred_fallthru
      _
    // Predicated region
    $region22: #{tpu_custom_call.1} parent=1 // pred_check
      _
    $region23: #{tpu_custom_call.1} parent=1 // pred_check_branch
      %451 = sbr.rel (0) target = $region25
    $region24: #{tpu_custom_call.1} parent=1 // pred_region
      %452 = dma.done [#allocation3], 128
    $region25: #{tpu_custom_call.1} parent=1 // pred_fallthru
      _
    %453 = vsyncpa [#allocation3], 1

</llo_original>
